<compile_context>
chip_gen: v6e
topology: v6e:2x2x1
jax: 0.10.0
libtpu: 0.0.40
codegen_flags: <defaults>
</compile_context>

<pallas_src>
import jax
import jax.numpy as jnp
from jax import lax
from jax.experimental import pallas as pl
from jax.experimental.pallas import tpu as pltpu


def _dwconv_kernel(x_ref, top_ref, bot_ref, w_ref, b_ref, o_ref, xe_ref):
    # x_ref   : (1, TH, W, C)   center rows of this tile
    # top_ref : (1, 1,  W, C)   row just above the tile (index clamped at top)
    # bot_ref : (1, 1,  W, C)   row just below the tile (index clamped at bottom)
    # w_ref   : (3, 3, C)       depthwise weights (kh, kw, c)
    # b_ref   : (1, C)          bias
    # o_ref   : (1, TH, W, C)   output tile
    # xe_ref  : (TH+2, W+2, C)  VMEM scratch: halo-padded tile
    i = pl.program_id(1)
    n_h = pl.num_programs(1)
    TH, W, C = o_ref.shape[1], o_ref.shape[2], o_ref.shape[3]
    dt = xe_ref.dtype

    # Left / right zero columns (these also cover the four corners).
    zero_col = jnp.zeros((TH + 2, 1, C), dt)
    xe_ref[:, 0:1, :] = zero_col
    xe_ref[:, W + 1:W + 2, :] = zero_col

    # Center rows.
    xe_ref[1:TH + 1, 1:W + 1, :] = x_ref[0]

    # Halo rows: neighbor rows, or zeros at the image top / bottom.
    zero_row = jnp.zeros((W, C), dt)
    xe_ref[0, 1:W + 1, :] = jnp.where(i > 0, top_ref[0, 0], zero_row)
    xe_ref[TH + 1, 1:W + 1, :] = jnp.where(i < n_h - 1, bot_ref[0, 0], zero_row)

    xe = xe_ref[...]                       # keep input dtype; cast per tap
    wf = w_ref[...].astype(jnp.float32)    # (3, 3, C)
    bf = b_ref[0].astype(jnp.float32)      # (C,)

    # f32 accumulation; initialized with the center tap + bias.
    acc = xe[1:1 + TH, 1:1 + W, :].astype(jnp.float32) * wf[1, 1] + bf
    for dh in range(3):
        for dw in range(3):
            if dh == 1 and dw == 1:
                continue
            tap = xe[dh:dh + TH, dw:dw + W, :].astype(jnp.float32)
            acc = acc + tap * wf[dh, dw]

    o_ref[0] = acc.astype(o_ref.dtype)


def _pick_row_tile(H, W, C, itemsize, target_bytes=1 << 20):
    """Largest divisor of H whose (TH, W, C) center block stays <= target_bytes."""
    th = 1
    for cand in range(1, H + 1):
        if H % cand == 0 and cand * W * C * itemsize <= target_bytes:
            th = cand
    return th


def dwconv_pallas(x, weight, bias, H, W, *, block_rows=None):
    """x: (B, N, C) with N == H * W; weight: (C, 1, 3, 3); bias: (C,).

    Returns (B, N, C), matching PyTorch DWConv.forward semantics.
    """
    B, N, C = x.shape
    assert N == H * W
    assert weight.shape == (C, 1, 3, 3)

    # (B, N, C) is already NHWC-contiguous -> free reshape, no transpose.
    x_nhwc = x.reshape(B, H, W, C)
    w_hwc = jnp.transpose(weight[:, 0, :, :], (1, 2, 0))   # (3, 3, C)
    b_2d = bias.reshape(1, C)

    itemsize = x.dtype.itemsize
    if block_rows is None:
        TH = _pick_row_tile(H, W, C, itemsize)
    else:
        TH = block_rows
        assert H % TH == 0
    n_h = H // TH

    flops = 18 * B * H * W * C
    bytes_accessed = (2 * B * H * W * C * itemsize
                      + weight.size * weight.dtype.itemsize
                      + bias.size * bias.dtype.itemsize)
    cost = pl.CostEstimate(flops=flops, transcendentals=0,
                           bytes_accessed=bytes_accessed)

    center_spec = pl.BlockSpec((1, TH, W, C), lambda b, i: (b, i, 0, 0))
    # Halo rows: block size 1 along H, so the block index IS the row index.
    top_spec = pl.BlockSpec((1, 1, W, C),
                            lambda b, i: (b, jnp.maximum(i * TH - 1, 0), 0, 0))
    bot_spec = pl.BlockSpec((1, 1, W, C),
                            lambda b, i: (b, jnp.minimum((i + 1) * TH, H - 1), 0, 0))

    out_nhwc = pl.pallas_call(
        _dwconv_kernel,
        out_shape=jax.ShapeDtypeStruct((B, H, W, C), x.dtype),
        grid_spec=pltpu.PrefetchScalarGridSpec(
            num_scalar_prefetch=0,
            grid=(B, n_h),
            in_specs=[
                center_spec,
                top_spec,
                bot_spec,
                pl.BlockSpec((3, 3, C), lambda b, i: (0, 0, 0)),
                pl.BlockSpec((1, C), lambda b, i: (0, 0)),
            ],
            out_specs=pl.BlockSpec((1, TH, W, C), lambda b, i: (b, i, 0, 0)),
            scratch_shapes=[pltpu.VMEM((TH + 2, W + 2, C), x.dtype)],
        ),
        compiler_params=pltpu.CompilerParams(
            dimension_semantics=("parallel", "parallel"),
            vmem_limit_bytes=32 * 1024 * 1024,
        ),
        cost_estimate=cost,
    )(x_nhwc, x_nhwc, x_nhwc, w_hwc, b_2d)

    return out_nhwc.reshape(B, N, C)


def _reference(x, weight, bias, H, W):
    """Pure-JAX reference mirroring the PyTorch module (NCHW depthwise conv)."""
    B, N, C = x.shape
    x_nchw = jnp.transpose(x, (0, 2, 1)).reshape(B, C, H, W)
    out = lax.conv_general_dilated(
        x_nchw, weight,
        window_strides=(1, 1),
        padding=((1, 1), (1, 1)),
        dimension_numbers=("NCHW", "OIHW", "NCHW"),
        feature_group_count=C,
        precision=lax.Precision.HIGHEST,
    ) + bias.reshape(1, C, 1, 1)
    return jnp.transpose(out.reshape(B, C, N), (0, 2, 1))


if __name__ == "__main__":
    # Small shapes consistent with DWConv.forward: x is (B, N, C), N = H * W.
    # C = 128 keeps the channel (lane) axis dense on TPU.
    B, C, H, W = 2, 128, 8, 8
    N = H * W

    key = jax.random.PRNGKey(0)
    kx, kw, kb = jax.random.split(key, 3)

    x = jax.random.normal(kx, (B, N, C), dtype=jnp.float32)
    weight = jax.random.normal(kw, (C, 1, 3, 3), dtype=jnp.float32) * 0.1
    bias = jax.random.normal(kb, (C,), dtype=jnp.float32) * 0.1

    out = dwconv_pallas(x, weight, bias, H, W)
    out = jax.block_until_ready(out)

    ref = _reference(x, weight, bias, H, W)
    assert out.shape == (B, N, C)
    assert jnp.allclose(out, ref, atol=1e-5, rtol=1e-5), "mismatch vs reference"

    print("KERNEL_OK")
</pallas_src>

<mosaic_0001>
module attributes {stable_mosaic.version = 11 : i64} {
  func.func @_dwconv_kernel(%arg0: i32, %arg1: i32, %arg2: memref<1x8x8x128xf32, #tpu.memory_space<vmem>>, %arg3: memref<1x1x8x128xf32, #tpu.memory_space<vmem>>, %arg4: memref<1x1x8x128xf32, #tpu.memory_space<vmem>>, %arg5: memref<3x3x128xf32, #tpu.memory_space<vmem>>, %arg6: memref<1x128xf32, #tpu.memory_space<vmem>>, %arg7: memref<1x8x8x128xf32, #tpu.memory_space<vmem>>, %arg8: memref<10x10x128xf32, #tpu.memory_space<vmem>>) attributes {dimension_semantics = [#tpu.dimension_semantics<parallel>, #tpu.dimension_semantics<parallel>], iteration_bounds = array<i64: 2, 1>, scalar_prefetch = 0 : i64, scratch_operands = 1 : i64, tpu.core_type = #tpu.core_type<tc>, window_params = [{transform_indices = @transform_0, window_bounds = array<i64: 1, 8, 8, 128>}, {transform_indices = @transform_1, window_bounds = array<i64: 1, 1, 8, 128>}, {transform_indices = @transform_2, window_bounds = array<i64: 1, 1, 8, 128>}, {pipeline_mode = #tpu.pipeline_mode<synchronous>, transform_indices = @transform_3, window_bounds = array<i64: 3, 3, 128>}, {pipeline_mode = #tpu.pipeline_mode<synchronous>, transform_indices = @transform_4, window_bounds = array<i64: 1, 128>}, {transform_indices = @transform_5, window_bounds = array<i64: 1, 8, 8, 128>}]} {
    %cst = arith.constant 0.000000e+00 : f32
    %0 = vector.broadcast %cst : f32 to vector<10x1x128xf32>
    %c0 = arith.constant 0 : index
    %c0_0 = arith.constant 0 : index
    %c0_1 = arith.constant 0 : index
    %1 = vector.load %arg8[%c0, %c0_0, %c0_1] : memref<10x10x128xf32, #tpu.memory_space<vmem>>, vector<10x1x128xf32>
    tpu.vector_store %arg8[%c0, %c0_0, %c0_1], %0 {strides = array<i32>} : memref<10x10x128xf32, #tpu.memory_space<vmem>>, vector<10x1x128xf32>,
    %c0_2 = arith.constant 0 : index
    %c9 = arith.constant 9 : index
    %c0_3 = arith.constant 0 : index
    %2 = vector.load %arg8[%c0_2, %c9, %c0_3] : memref<10x10x128xf32, #tpu.memory_space<vmem>>, vector<10x1x128xf32>
    tpu.vector_store %arg8[%c0_2, %c9, %c0_3], %0 {strides = array<i32>} : memref<10x10x128xf32, #tpu.memory_space<vmem>>, vector<10x1x128xf32>,
    %c0_4 = arith.constant 0 : index
    %c0_5 = arith.constant 0 : index
    %c0_6 = arith.constant 0 : index
    %c0_7 = arith.constant 0 : index
    %3 = vector.load %arg2[%c0_4, %c0_5, %c0_6, %c0_7] : memref<1x8x8x128xf32, #tpu.memory_space<vmem>>, vector<1x8x8x128xf32>
    %4 = vector.shape_cast %3 : vector<1x8x8x128xf32> to vector<8x8x128xf32>
    %c1 = arith.constant 1 : index
    %c1_8 = arith.constant 1 : index
    %c0_9 = arith.constant 0 : index
    %5 = vector.load %arg8[%c1, %c1_8, %c0_9] : memref<10x10x128xf32, #tpu.memory_space<vmem>>, vector<8x8x128xf32>
    tpu.vector_store %arg8[%c1, %c1_8, %c0_9], %4 {strides = array<i32>} : memref<10x10x128xf32, #tpu.memory_space<vmem>>, vector<8x8x128xf32>,
    %cst_10 = arith.constant 0.000000e+00 : f32
    %6 = vector.broadcast %cst_10 : f32 to vector<8x128xf32>
    %c0_i32 = arith.constant 0 : i32
    %7 = arith.cmpi sgt, %arg1, %c0_i32 : i32
    %c0_11 = arith.constant 0 : index
    %c0_12 = arith.constant 0 : index
    %c0_13 = arith.constant 0 : index
    %c0_14 = arith.constant 0 : index
    %8 = vector.load %arg3[%c0_11, %c0_12, %c0_13, %c0_14] : memref<1x1x8x128xf32, #tpu.memory_space<vmem>>, vector<1x1x8x128xf32>
    %9 = vector.shape_cast %8 : vector<1x1x8x128xf32> to vector<8x128xf32>
    %10 = arith.select %7, %9, %6 : vector<8x128xf32>
    %c0_15 = arith.constant 0 : index
    %c1_16 = arith.constant 1 : index
    %c0_17 = arith.constant 0 : index
    %11 = vector.load %arg8[%c0_15, %c1_16, %c0_17] : memref<10x10x128xf32, #tpu.memory_space<vmem>>, vector<1x8x128xf32>
    %12 = vector.shape_cast %11 : vector<1x8x128xf32> to vector<8x128xf32>
    %13 = vector.shape_cast %10 : vector<8x128xf32> to vector<1x8x128xf32>
    tpu.vector_store %arg8[%c0_15, %c1_16, %c0_17], %13 {strides = array<i32>} : memref<10x10x128xf32, #tpu.memory_space<vmem>>, vector<1x8x128xf32>,
    %c0_i32_18 = arith.constant 0 : i32
    %14 = arith.cmpi slt, %arg1, %c0_i32_18 : i32
    %c0_19 = arith.constant 0 : index
    %c0_20 = arith.constant 0 : index
    %c0_21 = arith.constant 0 : index
    %c0_22 = arith.constant 0 : index
    %15 = vector.load %arg4[%c0_19, %c0_20, %c0_21, %c0_22] : memref<1x1x8x128xf32, #tpu.memory_space<vmem>>, vector<1x1x8x128xf32>
    %16 = vector.shape_cast %15 : vector<1x1x8x128xf32> to vector<8x128xf32>
    %17 = arith.select %14, %16, %6 : vector<8x128xf32>
    %c9_23 = arith.constant 9 : index
    %c1_24 = arith.constant 1 : index
    %c0_25 = arith.constant 0 : index
    %18 = vector.load %arg8[%c9_23, %c1_24, %c0_25] : memref<10x10x128xf32, #tpu.memory_space<vmem>>, vector<1x8x128xf32>
    %19 = vector.shape_cast %18 : vector<1x8x128xf32> to vector<8x128xf32>
    %20 = vector.shape_cast %17 : vector<8x128xf32> to vector<1x8x128xf32>
    tpu.vector_store %arg8[%c9_23, %c1_24, %c0_25], %20 {strides = array<i32>} : memref<10x10x128xf32, #tpu.memory_space<vmem>>, vector<1x8x128xf32>,
    %c0_26 = arith.constant 0 : index
    %c0_27 = arith.constant 0 : index
    %c0_28 = arith.constant 0 : index
    %21 = vector.load %arg8[%c0_26, %c0_27, %c0_28] : memref<10x10x128xf32, #tpu.memory_space<vmem>>, vector<10x10x128xf32>
    %c0_29 = arith.constant 0 : index
    %c0_30 = arith.constant 0 : index
    %c0_31 = arith.constant 0 : index
    %22 = vector.load %arg5[%c0_29, %c0_30, %c0_31] : memref<3x3x128xf32, #tpu.memory_space<vmem>>, vector<3x3x128xf32>
    %c0_32 = arith.constant 0 : index
    %c0_33 = arith.constant 0 : index
    %23 = vector.load %arg6[%c0_32, %c0_33] : memref<1x128xf32, #tpu.memory_space<vmem>>, vector<1x128xf32>
    %24 = vector.shape_cast %23 : vector<1x128xf32> to vector<128xf32>
    %25 = vector.extract_strided_slice %21 {offsets = [1, 1, 0], sizes = [8, 8, 128], strides = [1, 1, 1]} : vector<10x10x128xf32> to vector<8x8x128xf32>
    %26 = vector.extract_strided_slice %22 {offsets = [1, 1, 0], sizes = [1, 1, 128], strides = [1, 1, 1]} : vector<3x3x128xf32> to vector<1x1x128xf32>
    %27 = vector.shape_cast %26 : vector<1x1x128xf32> to vector<128xf32>
    %28 = vector.shape_cast %27 : vector<128xf32> to vector<1x1x128xf32>
    %29 = vector.broadcast %28 : vector<1x1x128xf32> to vector<8x8x128xf32>
    %30 = arith.mulf %25, %29 : vector<8x8x128xf32>
    %31 = vector.shape_cast %24 : vector<128xf32> to vector<1x1x128xf32>
    %32 = vector.broadcast %31 : vector<1x1x128xf32> to vector<8x8x128xf32>
    %33 = arith.addf %30, %32 : vector<8x8x128xf32>
    %34 = vector.extract_strided_slice %21 {offsets = [0, 0, 0], sizes = [8, 8, 128], strides = [1, 1, 1]} : vector<10x10x128xf32> to vector<8x8x128xf32>
    %35 = vector.extract_strided_slice %22 {offsets = [0, 0, 0], sizes = [1, 1, 128], strides = [1, 1, 1]} : vector<3x3x128xf32> to vector<1x1x128xf32>
    %36 = vector.shape_cast %35 : vector<1x1x128xf32> to vector<128xf32>
    %37 = vector.shape_cast %36 : vector<128xf32> to vector<1x1x128xf32>
    %38 = vector.broadcast %37 : vector<1x1x128xf32> to vector<8x8x128xf32>
    %39 = arith.mulf %34, %38 : vector<8x8x128xf32>
    %40 = arith.addf %33, %39 : vector<8x8x128xf32>
    %41 = vector.extract_strided_slice %21 {offsets = [0, 1, 0], sizes = [8, 8, 128], strides = [1, 1, 1]} : vector<10x10x128xf32> to vector<8x8x128xf32>
    %42 = vector.extract_strided_slice %22 {offsets = [0, 1, 0], sizes = [1, 1, 128], strides = [1, 1, 1]} : vector<3x3x128xf32> to vector<1x1x128xf32>
    %43 = vector.shape_cast %42 : vector<1x1x128xf32> to vector<128xf32>
    %44 = vector.shape_cast %43 : vector<128xf32> to vector<1x1x128xf32>
    %45 = vector.broadcast %44 : vector<1x1x128xf32> to vector<8x8x128xf32>
    %46 = arith.mulf %41, %45 : vector<8x8x128xf32>
    %47 = arith.addf %40, %46 : vector<8x8x128xf32>
    %48 = vector.extract_strided_slice %21 {offsets = [0, 2, 0], sizes = [8, 8, 128], strides = [1, 1, 1]} : vector<10x10x128xf32> to vector<8x8x128xf32>
    %49 = vector.extract_strided_slice %22 {offsets = [0, 2, 0], sizes = [1, 1, 128], strides = [1, 1, 1]} : vector<3x3x128xf32> to vector<1x1x128xf32>
    %50 = vector.shape_cast %49 : vector<1x1x128xf32> to vector<128xf32>
    %51 = vector.shape_cast %50 : vector<128xf32> to vector<1x1x128xf32>
    %52 = vector.broadcast %51 : vector<1x1x128xf32> to vector<8x8x128xf32>
    %53 = arith.mulf %48, %52 : vector<8x8x128xf32>
    %54 = arith.addf %47, %53 : vector<8x8x128xf32>
    %55 = vector.extract_strided_slice %21 {offsets = [1, 0, 0], sizes = [8, 8, 128], strides = [1, 1, 1]} : vector<10x10x128xf32> to vector<8x8x128xf32>
    %56 = vector.extract_strided_slice %22 {offsets = [1, 0, 0], sizes = [1, 1, 128], strides = [1, 1, 1]} : vector<3x3x128xf32> to vector<1x1x128xf32>
    %57 = vector.shape_cast %56 : vector<1x1x128xf32> to vector<128xf32>
    %58 = vector.shape_cast %57 : vector<128xf32> to vector<1x1x128xf32>
    %59 = vector.broadcast %58 : vector<1x1x128xf32> to vector<8x8x128xf32>
    %60 = arith.mulf %55, %59 : vector<8x8x128xf32>
    %61 = arith.addf %54, %60 : vector<8x8x128xf32>
    %62 = vector.extract_strided_slice %21 {offsets = [1, 2, 0], sizes = [8, 8, 128], strides = [1, 1, 1]} : vector<10x10x128xf32> to vector<8x8x128xf32>
    %63 = vector.extract_strided_slice %22 {offsets = [1, 2, 0], sizes = [1, 1, 128], strides = [1, 1, 1]} : vector<3x3x128xf32> to vector<1x1x128xf32>
    %64 = vector.shape_cast %63 : vector<1x1x128xf32> to vector<128xf32>
    %65 = vector.shape_cast %64 : vector<128xf32> to vector<1x1x128xf32>
    %66 = vector.broadcast %65 : vector<1x1x128xf32> to vector<8x8x128xf32>
    %67 = arith.mulf %62, %66 : vector<8x8x128xf32>
    %68 = arith.addf %61, %67 : vector<8x8x128xf32>
    %69 = vector.extract_strided_slice %21 {offsets = [2, 0, 0], sizes = [8, 8, 128], strides = [1, 1, 1]} : vector<10x10x128xf32> to vector<8x8x128xf32>
    %70 = vector.extract_strided_slice %22 {offsets = [2, 0, 0], sizes = [1, 1, 128], strides = [1, 1, 1]} : vector<3x3x128xf32> to vector<1x1x128xf32>
    %71 = vector.shape_cast %70 : vector<1x1x128xf32> to vector<128xf32>
    %72 = vector.shape_cast %71 : vector<128xf32> to vector<1x1x128xf32>
    %73 = vector.broadcast %72 : vector<1x1x128xf32> to vector<8x8x128xf32>
    %74 = arith.mulf %69, %73 : vector<8x8x128xf32>
    %75 = arith.addf %68, %74 : vector<8x8x128xf32>
    %76 = vector.extract_strided_slice %21 {offsets = [2, 1, 0], sizes = [8, 8, 128], strides = [1, 1, 1]} : vector<10x10x128xf32> to vector<8x8x128xf32>
    %77 = vector.extract_strided_slice %22 {offsets = [2, 1, 0], sizes = [1, 1, 128], strides = [1, 1, 1]} : vector<3x3x128xf32> to vector<1x1x128xf32>
    %78 = vector.shape_cast %77 : vector<1x1x128xf32> to vector<128xf32>
    %79 = vector.shape_cast %78 : vector<128xf32> to vector<1x1x128xf32>
    %80 = vector.broadcast %79 : vector<1x1x128xf32> to vector<8x8x128xf32>
    %81 = arith.mulf %76, %80 : vector<8x8x128xf32>
    %82 = arith.addf %75, %81 : vector<8x8x128xf32>
    %83 = vector.extract_strided_slice %21 {offsets = [2, 2, 0], sizes = [8, 8, 128], strides = [1, 1, 1]} : vector<10x10x128xf32> to vector<8x8x128xf32>
    %84 = vector.extract_strided_slice %22 {offsets = [2, 2, 0], sizes = [1, 1, 128], strides = [1, 1, 1]} : vector<3x3x128xf32> to vector<1x1x128xf32>
    %85 = vector.shape_cast %84 : vector<1x1x128xf32> to vector<128xf32>
    %86 = vector.shape_cast %85 : vector<128xf32> to vector<1x1x128xf32>
    %87 = vector.broadcast %86 : vector<1x1x128xf32> to vector<8x8x128xf32>
    %88 = arith.mulf %83, %87 : vector<8x8x128xf32>
    %89 = arith.addf %82, %88 : vector<8x8x128xf32>
    %c0_34 = arith.constant 0 : index
    %c0_35 = arith.constant 0 : index
    %c0_36 = arith.constant 0 : index
    %c0_37 = arith.constant 0 : index
    %90 = vector.load %arg7[%c0_34, %c0_35, %c0_36, %c0_37] : memref<1x8x8x128xf32, #tpu.memory_space<vmem>>, vector<1x8x8x128xf32>
    %91 = vector.shape_cast %90 : vector<1x8x8x128xf32> to vector<8x8x128xf32>
    %92 = vector.shape_cast %89 : vector<8x8x128xf32> to vector<1x8x8x128xf32>
    tpu.vector_store %arg7[%c0_34, %c0_35, %c0_36, %c0_37], %92 {strides = array<i32>} : memref<1x8x8x128xf32, #tpu.memory_space<vmem>>, vector<1x8x8x128xf32>,
    return
  }
  func.func @transform_0(%arg0: i32, %arg1: i32) -> (i32, i32, i32, i32) {
    %c0_i32 = arith.constant 0 : i32
    %c0_i32_0 = arith.constant 0 : i32
    %c0_i32_1 = arith.constant 0 : i32
    return %arg0, %arg1, %c0_i32, %c0_i32_0 : i32, i32, i32, i32
  }
  func.func @transform_1(%arg0: i32, %arg1: i32) -> (i32, i32, i32, i32) {
    %c8_i32 = arith.constant 8 : i32
    %0 = arith.muli %arg1, %c8_i32 : i32
    %c1_i32 = arith.constant 1 : i32
    %1 = arith.subi %0, %c1_i32 : i32
    %c0_i32 = arith.constant 0 : i32
    %2 = arith.maxsi %1, %c0_i32 : i32
    %c0_i32_0 = arith.constant 0 : i32
    %c0_i32_1 = arith.constant 0 : i32
    %c0_i32_2 = arith.constant 0 : i32
    return %arg0, %2, %c0_i32_0, %c0_i32_1 : i32, i32, i32, i32
  }
  func.func @transform_2(%arg0: i32, %arg1: i32) -> (i32, i32, i32, i32) {
    %c1_i32 = arith.constant 1 : i32
    %0 = arith.addi %arg1, %c1_i32 : i32
    %c8_i32 = arith.constant 8 : i32
    %1 = arith.muli %0, %c8_i32 : i32
    %c7_i32 = arith.constant 7 : i32
    %2 = arith.minsi %1, %c7_i32 : i32
    %c0_i32 = arith.constant 0 : i32
    %c0_i32_0 = arith.constant 0 : i32
    %c0_i32_1 = arith.constant 0 : i32
    return %arg0, %2, %c0_i32, %c0_i32_0 : i32, i32, i32, i32
  }
  func.func @transform_3(%arg0: i32, %arg1: i32) -> (i32, i32, i32) {
    %c0_i32 = arith.constant 0 : i32
    %c0_i32_0 = arith.constant 0 : i32
    %c0_i32_1 = arith.constant 0 : i32
    %c0_i32_2 = arith.constant 0 : i32
    return %c0_i32, %c0_i32_0, %c0_i32_1 : i32, i32, i32
  }
  func.func @transform_4(%arg0: i32, %arg1: i32) -> (i32, i32) {
    %c0_i32 = arith.constant 0 : i32
    %c0_i32_0 = arith.constant 0 : i32
    %c0_i32_1 = arith.constant 0 : i32
    return %c0_i32, %c0_i32_0 : i32, i32
  }
  func.func @transform_5(%arg0: i32, %arg1: i32) -> (i32, i32, i32, i32) {
    %c0_i32 = arith.constant 0 : i32
    %c0_i32_0 = arith.constant 0 : i32
    %c0_i32_1 = arith.constant 0 : i32
    return %arg0, %arg1, %c0_i32, %c0_i32_0 : i32, i32, i32, i32
  }
}

</mosaic_0001>

<llo_original>
// kernel: tpu_custom_call.1
$region0: #{tpu_custom_call.1}
  #allocation0 [shape = 'u32[]', space=smem, size = 0x4, offset = 0x4, fixed_abs, tag = 'smem constant byte address 0x4 - core index']
  #allocation1 [shape = 'u32[144,128]{1,0:T(1,128)}', space=vmem, size = 0x12000, scoped, tag = 'internal scratch']
  #allocation2 [shape = 'f32[10,10,128]{2,1,0:T(8,128)}', space=vmem, size = 0x14000, scoped, tag = 'scratch operand']
  %s0 = inlined_call_operand.hbm [shape: f32[2,8,8,128], index: 0, kind: input, shape index: {}]
  %s1 = inlined_call_operand.hbm [shape: f32[2,8,8,128], index: 1, kind: input, shape index: {}]
  %s2 = inlined_call_operand.hbm [shape: f32[2,8,8,128], index: 2, kind: input, shape index: {}]
  %s3 = inlined_call_operand.hbm [shape: f32[3,3,128], index: 3, kind: input, shape index: {}]
  %s4 = inlined_call_operand.vmem [shape: f32[1,128], index: 4, kind: input, shape index: {}]
  %s5 = inlined_call_operand.hbm [shape: f32[2,8,8,128], index: 5, kind: output, shape index: {}]
  %s6 = sld [smem:[#allocation0]]
  $region69: #{tpu_custom_call.1} parent=0
    _
  %s8 = ssub.s32 1, %s6
  %s9 = scalar_select 0, %s8, %s6
  $region1: #{tpu_custom_call.1} parent=0
    #allocation3 [shape = 'u8[65536]{0}', space=vmem, size = 0x10000, scoped, tag = 'input window, operand 0']
    #allocation4 [shape = 's32[2]{0}', space=sflag, size = 0x8, scoped, tag = 'scoped memory for tpu_custom_call.1']
    #allocation5 [shape = 's32[2]{0}', space=sflag, size = 0x8, scoped, tag = 'scoped memory for tpu_custom_call.1']
    #allocation6 [shape = 'u8[8192]{0}', space=vmem, size = 0x2000, scoped, tag = 'input window, operand 1']
    #allocation7 [shape = 's32[2]{0}', space=sflag, size = 0x8, scoped, tag = 'scoped memory for tpu_custom_call.1']
    #allocation8 [shape = 'u8[8192]{0}', space=vmem, size = 0x2000, scoped, tag = 'input window, operand 2']
    #allocation9 [shape = 'u8[6144]{0}', space=vmem, size = 0x1800, scoped, tag = 'input window, operand 3, single buffered']
    #allocation10 [shape = 's32[1]{0}', space=sflag, size = 0x4, scoped, tag = 'scoped memory for tpu_custom_call.1']
    #allocation11 [shape = 'u8[65536]{0}', space=vmem, size = 0x10000, scoped, tag = 'output window, operand 0']
    %10 = vsyncpa [#allocation4], 0
    %s11 = scalar_lea.sflag [#allocation4], 1
    %12 = vsyncpa %s11, 0
    %13 = vsyncpa [#allocation7], 0
    %s14 = scalar_lea.sflag [#allocation7], 1
    %15 = vsyncpa %s14, 0
    %16 = vsyncpa [#allocation10], 0
    %17 = vsyncpa [#allocation5], 0
    %s18 = scalar_lea.sflag [#allocation5], 1
    %19 = vsyncpa %s18, 0
    loop: start=0, step=1, limit=4
    $region2: #{tpu_custom_call.1} parent=1 // loop_pre_header
      _
    $region3: #{tpu_custom_call.1} parent=1 // loop_header
      %s21 = sphi 0, %s25
      %p22 = scmp.ge.s32.totalorder %s21, 4
      %s28 = sphi 0, %s40
      %s29 = sphi 0, %s36
      %s30 = sphi 0, %s28
      %s31 = sphi 0, %s29
      %s32 = sphi 0, %s30
      %s33 = sphi 0, %s31
      %s45 = sphi 0, %s47
      %s48 = sphi 0, %s45
      %s49 = sphi 0, %s48
      %s65 = sphi 0, %s49
      %s81 = sphi 0, %s83
      %s84 = sphi 0, %s81
      %s85 = sphi 0, %s84
      %s101 = sphi 0, %s85
      %s117 = sphi 0, %s119
      %s120 = sphi 0, %s117
      %s121 = sphi 0, %s120
      %s137 = sphi 0, %s121
      %s141 = sphi 0, %s141
      %s143 = sphi 0, %s141
      %s144 = sphi 0, %s143
      %s158 = sphi 0, %s144
      %s162 = sphi 0, %s162
      %s164 = sphi 0, %s162
      %s165 = sphi 0, %s164
      %s179 = sphi 0, %s165
      %s187 = sphi 0, %s189
      %s190 = sphi 0, %s187
      %s191 = sphi 0, %s190
      %s207 = sphi 0, %s191
    $region4: #{tpu_custom_call.1} parent=1 // loop_header_branch
      %24 = sbr.rel (%p22) target = $region8
    $region5: #{tpu_custom_call.1} parent=1 // loop_body
      %s26 = ssub.s32 %s21, 1
      %s27 = ssub.s32 %s21, 2
      %s34 = sadd.s32 1, %s29
      %p35 = scmp.ge.s32.totalorder %s34, 1
      %s36 = scalar_select %p35, 0, %s34
      %s37 = sadd.s32 1, %s28
      %s38 = scalar_select %p35, %s37, %s28
      %p39 = scmp.ge.s32.totalorder %s38, 2
      %s40 = scalar_select %p39, 0, %s38
      %s41 = ssub.s32 %s28, %s40
      %s42 = ssub.s32 %s29, %s36
      %s43 = sor.u32 %s41, %s42
      %p44 = scmp.eq.s32.totalorder %s43, 0
      %s46 = sadd.s32 %s45, 1
      %s47 = scalar_select %p44, %s45, %s46
      %p50 = pneg %p44
      %p51 = scmp.eq.s32.totalorder %s21, 1
      %p52 = por %p50, %p51
      %p53 = scmp.ne.s32.totalorder %s45, %s48
      %p54 = scmp.eq.s32.totalorder %s21, 0
      %p55 = por %p53, %p54
      %p56 = scmp.ne.s32.totalorder %s45, %s48
      %p57 = scmp.eq.s32.totalorder %s26, 1
      %p58 = por %p56, %p57
      %p59 = scmp.ne.s32.totalorder %s48, %s49
      %p60 = scmp.eq.s32.totalorder %s26, 0
      %p61 = por %p59, %p60
      %p62 = scmp.ne.s32.totalorder %s48, %s49
      %p63 = scmp.eq.s32.totalorder %s27, 1
      %p64 = por %p62, %p63
      %p66 = scmp.ne.s32.totalorder %s49, %s65
      %p67 = scmp.eq.s32.totalorder %s27, 0
      %p68 = por %p66, %p67
      %s69 = smul.u32 %s29, 8
      %s70 = ssub.s32 %s69, 1
      %p71 = scmp.gt.s32.totalorder %s70, 0
      %s72 = scalar_select %p71, %s70, 0
      %s73 = smul.u32 %s36, 8
      %s74 = ssub.s32 %s73, 1
      %p75 = scmp.gt.s32.totalorder %s74, 0
      %s76 = scalar_select %p75, %s74, 0
      %s77 = ssub.s32 %s28, %s40
      %s78 = ssub.s32 %s72, %s76
      %s79 = sor.u32 %s77, %s78
      %p80 = scmp.eq.s32.totalorder %s79, 0
      %s82 = sadd.s32 %s81, 1
      %s83 = scalar_select %p80, %s81, %s82
      %p86 = pneg %p80
      %p87 = scmp.eq.s32.totalorder %s21, 1
      %p88 = por %p86, %p87
      %p89 = scmp.ne.s32.totalorder %s81, %s84
      %p90 = scmp.eq.s32.totalorder %s21, 0
      %p91 = por %p89, %p90
      %p92 = scmp.ne.s32.totalorder %s81, %s84
      %p93 = scmp.eq.s32.totalorder %s26, 1
      %p94 = por %p92, %p93
      %p95 = scmp.ne.s32.totalorder %s84, %s85
      %p96 = scmp.eq.s32.totalorder %s26, 0
      %p97 = por %p95, %p96
      %p98 = scmp.ne.s32.totalorder %s84, %s85
      %p99 = scmp.eq.s32.totalorder %s27, 1
      %p100 = por %p98, %p99
      %p102 = scmp.ne.s32.totalorder %s85, %s101
      %p103 = scmp.eq.s32.totalorder %s27, 0
      %p104 = por %p102, %p103
      %s105 = sadd.s32 %s29, 1
      %s106 = smul.u32 %s105, 8
      %p107 = scmp.lt.s32.totalorder %s106, 7
      %s108 = scalar_select %p107, %s106, 7
      %s109 = sadd.s32 %s36, 1
      %s110 = smul.u32 %s109, 8
      %p111 = scmp.lt.s32.totalorder %s110, 7
      %s112 = scalar_select %p111, %s110, 7
      %s113 = ssub.s32 %s28, %s40
      %s114 = ssub.s32 %s108, %s112
      %s115 = sor.u32 %s113, %s114
      %p116 = scmp.eq.s32.totalorder %s115, 0
      %s118 = sadd.s32 %s117, 1
      %s119 = scalar_select %p116, %s117, %s118
      %p122 = pneg %p116
      %p123 = scmp.eq.s32.totalorder %s21, 1
      %p124 = por %p122, %p123
      %p125 = scmp.ne.s32.totalorder %s117, %s120
      %p126 = scmp.eq.s32.totalorder %s21, 0
      %p127 = por %p125, %p126
      %p128 = scmp.ne.s32.totalorder %s117, %s120
      %p129 = scmp.eq.s32.totalorder %s26, 1
      %p130 = por %p128, %p129
      %p131 = scmp.ne.s32.totalorder %s120, %s121
      %p132 = scmp.eq.s32.totalorder %s26, 0
      %p133 = por %p131, %p132
      %p134 = scmp.ne.s32.totalorder %s120, %s121
      %p135 = scmp.eq.s32.totalorder %s27, 1
      %p136 = por %p134, %p135
      %p138 = scmp.ne.s32.totalorder %s121, %s137
      %p139 = scmp.eq.s32.totalorder %s27, 0
      %p140 = por %p138, %p139
      %s142 = sadd.s32 %s141, 1
      %p145 = scmp.eq.s32.totalorder %s21, 1
      %p146 = scmp.ne.s32.totalorder %s141, %s143
      %p147 = scmp.eq.s32.totalorder %s21, 0
      %p148 = por %p146, %p147
      %p149 = scmp.ne.s32.totalorder %s141, %s143
      %p150 = scmp.eq.s32.totalorder %s26, 1
      %p151 = por %p149, %p150
      %p152 = scmp.ne.s32.totalorder %s143, %s144
      %p153 = scmp.eq.s32.totalorder %s26, 0
      %p154 = por %p152, %p153
      %p155 = scmp.ne.s32.totalorder %s143, %s144
      %p156 = scmp.eq.s32.totalorder %s27, 1
      %p157 = por %p155, %p156
      %p159 = scmp.ne.s32.totalorder %s144, %s158
      %p160 = scmp.eq.s32.totalorder %s27, 0
      %p161 = por %p159, %p160
      %s163 = sadd.s32 %s162, 1
      %p166 = scmp.eq.s32.totalorder %s21, 1
      %p167 = scmp.ne.s32.totalorder %s162, %s164
      %p168 = scmp.eq.s32.totalorder %s21, 0
      %p169 = por %p167, %p168
      %p170 = scmp.ne.s32.totalorder %s162, %s164
      %p171 = scmp.eq.s32.totalorder %s26, 1
      %p172 = por %p170, %p171
      %p173 = scmp.ne.s32.totalorder %s164, %s165
      %p174 = scmp.eq.s32.totalorder %s26, 0
      %p175 = por %p173, %p174
      %p176 = scmp.ne.s32.totalorder %s164, %s165
      %p177 = scmp.eq.s32.totalorder %s27, 1
      %p178 = por %p176, %p177
      %p180 = scmp.ne.s32.totalorder %s165, %s179
      %p181 = scmp.eq.s32.totalorder %s27, 0
      %p182 = por %p180, %p181
      %s183 = ssub.s32 %s28, %s40
      %s184 = ssub.s32 %s29, %s36
      %s185 = sor.u32 %s183, %s184
      %p186 = scmp.eq.s32.totalorder %s185, 0
      %s188 = sadd.s32 %s187, 1
      %s189 = scalar_select %p186, %s187, %s188
      %p192 = pneg %p186
      %p193 = scmp.eq.s32.totalorder %s21, 1
      %p194 = por %p192, %p193
      %p195 = scmp.ne.s32.totalorder %s187, %s190
      %p196 = scmp.eq.s32.totalorder %s21, 0
      %p197 = por %p195, %p196
      %p198 = scmp.ne.s32.totalorder %s187, %s190
      %p199 = scmp.eq.s32.totalorder %s26, 1
      %p200 = por %p198, %p199
      %p201 = scmp.ne.s32.totalorder %s190, %s191
      %p202 = scmp.eq.s32.totalorder %s26, 0
      %p203 = por %p201, %p202
      %p204 = scmp.ne.s32.totalorder %s190, %s191
      %p205 = scmp.eq.s32.totalorder %s27, 1
      %p206 = por %p204, %p205
      %p208 = scmp.ne.s32.totalorder %s191, %s207
      %p209 = scmp.eq.s32.totalorder %s27, 0
      %p210 = por %p208, %p209
      %p211 = scmp.le.s32.totalorder 1, %s21
      %p212 = scmp.lt.s32.totalorder %s21, 3
      %p213 = pnand %p211, %p212
      %p214 = pneg %p213
      // Predicated region
      $region9: #{tpu_custom_call.1} parent=5 // pred_check
        _
      $region10: #{tpu_custom_call.1} parent=5 // pred_check_branch
        %216 = sbr.rel (%p213) target = $region12
      $region11: #{tpu_custom_call.1} parent=5 // pred_region
        %s217 = ssub.s32 %s21, 1
        // Predicated region
        $region13: #{tpu_custom_call.1} parent=11 // pred_check
          %p218 = pneg %p154
        $region14: #{tpu_custom_call.1} parent=11 // pred_check_branch
          %220 = sbr.rel (%p218) target = $region16
        $region15: #{tpu_custom_call.1} parent=11 // pred_region
          %s222 = ssub.s32 192, 192
          %223 = vsyncadd [#allocation10], %s222
          %s224 = sshll.u32 [#allocation9], 4
          %s225 = int_to_ptr.vmem [resolvable:$true] %s224
          %230 = dma.hbm_to_vmem [thread:$0]  %s3, 192, %s225, [#allocation10], 64, 64, 4
        $region16: #{tpu_custom_call.1} parent=11 // pred_fallthru
          _
        // Predicated region
        $region17: #{tpu_custom_call.1} parent=11 // pred_check
          %p231 = pneg %p175
        $region18: #{tpu_custom_call.1} parent=11 // pred_check_branch
          %233 = sbr.rel (%p231) target = $region20
        $region19: #{tpu_custom_call.1} parent=11 // pred_region
          _
        $region20: #{tpu_custom_call.1} parent=11 // pred_fallthru
          _
      $region12: #{tpu_custom_call.1} parent=5 // pred_fallthru
        _
      %p234 = scmp.lt.s32.totalorder %s21, 2
      // Predicated region
      $region21: #{tpu_custom_call.1} parent=5 // pred_check
        %p235 = pneg %p234
      $region22: #{tpu_custom_call.1} parent=5 // pred_check_branch
        %237 = sbr.rel (%p235) target = $region24
      $region23: #{tpu_custom_call.1} parent=5 // pred_region
        // Predicated region
        $region25: #{tpu_custom_call.1} parent=23 // pred_check
          %p238 = pneg %p55
        $region26: #{tpu_custom_call.1} parent=23 // pred_check_branch
          %240 = sbr.rel (%p238) target = $region28
        $region27: #{tpu_custom_call.1} parent=23 // pred_region
          %s241 = sand.u32 %s45, 1
          %s242 = scalar_lea.sflag [#allocation4], %s241
          %s243 = sand.u32 %s45, 1
          %s244 = smul.addr %s243, 64
          %s245 = scalar_lea.vmem [#allocation3], %s244
          %s246 = smul.u32 8, %s29
          %s248 = ssub.s32 1024, 1024
          %249 = vsyncadd %s242, %s248
          %s250 = smul.addr %s28, 8
          %s251 = sadd.s32 %s246, %s250
          %s252 = smul.addr %s251, 128
          %s253 = scalar_lea.hbm %s0, %s252
          %s254 = sshll.u32 %s245, 4
          %s255 = int_to_ptr.vmem [resolvable:$true] %s254
          %260 = dma.hbm_to_vmem [thread:$0]  %s253, 1024, %s255, %s242, 128, 128, 8
        $region28: #{tpu_custom_call.1} parent=23 // pred_fallthru
          _
        // Predicated region
        $region29: #{tpu_custom_call.1} parent=23 // pred_check
          %p261 = pneg %p91
        $region30: #{tpu_custom_call.1} parent=23 // pred_check_branch
          %263 = sbr.rel (%p261) target = $region32
        $region31: #{tpu_custom_call.1} parent=23 // pred_region
          %s264 = sand.u32 %s21, 1
          %s265 = scalar_lea.sflag [#allocation7], %s264
          %s266 = sand.u32 %s81, 1
          %s267 = smul.addr %s266, 8
          %s268 = scalar_lea.vmem [#allocation6], %s267
          %s269 = smul.u32 %s29, 8
          %s270 = ssub.s32 %s269, 1
          %p271 = scmp.gt.s32.totalorder %s270, 0
          %s272 = scalar_select %p271, %s270, 0
          %s274 = ssub.s32 128, 128
          %275 = vsyncadd %s265, %s274
          %s276 = smul.addr %s28, 8
          %s277 = sadd.s32 %s272, %s276
          %s278 = smul.addr %s277, 128
          %s279 = scalar_lea.hbm %s1, %s278
          %s281 = sshll.u32 %s268, 4
          %s282 = int_to_ptr.vmem [resolvable:$true] %s281
          %284 = dma.hbm_to_vmem [thread:$0]  %s279, 128, %s282, %s265
        $region32: #{tpu_custom_call.1} parent=23 // pred_fallthru
          _
        // Predicated region
        $region33: #{tpu_custom_call.1} parent=23 // pred_check
          %p285 = pneg %p127
        $region34: #{tpu_custom_call.1} parent=23 // pred_check_branch
          %287 = sbr.rel (%p285) target = $region36
        $region35: #{tpu_custom_call.1} parent=23 // pred_region
          %s288 = sand.u32 %s21, 1
          %s289 = scalar_lea.sflag [#allocation7], %s288
          %s290 = sand.u32 %s117, 1
          %s291 = smul.addr %s290, 8
          %s292 = scalar_lea.vmem [#allocation8], %s291
          %s293 = sadd.s32 %s29, 1
          %s294 = smul.u32 %s293, 8
          %p295 = scmp.lt.s32.totalorder %s294, 7
          %s296 = scalar_select %p295, %s294, 7
          %s298 = ssub.s32 128, 128
          %299 = vsyncadd %s289, %s298
          %s300 = smul.addr %s28, 8
          %s301 = sadd.s32 %s296, %s300
          %s302 = smul.addr %s301, 128
          %s303 = scalar_lea.hbm %s2, %s302
          %s305 = sshll.u32 %s292, 4
          %s306 = int_to_ptr.vmem [resolvable:$true] %s305
          %308 = dma.hbm_to_vmem [thread:$0]  %s303, 128, %s306, %s289
        $region36: #{tpu_custom_call.1} parent=23 // pred_fallthru
          _
      $region24: #{tpu_custom_call.1} parent=5 // pred_fallthru
        _
      %p309 = scmp.le.s32.totalorder 1, %s21
      %p310 = scmp.lt.s32.totalorder %s21, 3
      %p311 = pnand %p309, %p310
      %p312 = pneg %p311
      // Predicated region
      $region37: #{tpu_custom_call.1} parent=5 // pred_check
        _
      $region38: #{tpu_custom_call.1} parent=5 // pred_check_branch
        %314 = sbr.rel (%p311) target = $region40
      $region39: #{tpu_custom_call.1} parent=5 // pred_region
        %s315 = ssub.s32 %s21, 1
        %s316 = sand.u32 %s48, 1
        %s317 = scalar_lea.sflag [#allocation4], %s316
        %s318 = sand.u32 %s48, 1
        %s319 = smul.addr %s318, 64
        %s320 = scalar_lea.vmem [#allocation3], %s319
        // Predicated region
        $region41: #{tpu_custom_call.1} parent=39 // pred_check
          %p321 = pneg %p61
        $region42: #{tpu_custom_call.1} parent=39 // pred_check_branch
          %323 = sbr.rel (%p321) target = $region44
        $region43: #{tpu_custom_call.1} parent=39 // pred_region
          %324 = dma.done %s317, 1024
        $region44: #{tpu_custom_call.1} parent=39 // pred_fallthru
          _
        %s325 = sand.u32 %s26, 1
        %s326 = scalar_lea.sflag [#allocation7], %s325
        %s327 = sand.u32 %s84, 1
        %s328 = smul.addr %s327, 8
        %s329 = scalar_lea.vmem [#allocation6], %s328
        // Predicated region
        $region45: #{tpu_custom_call.1} parent=39 // pred_check
          %p330 = pneg %p97
        $region46: #{tpu_custom_call.1} parent=39 // pred_check_branch
          %332 = sbr.rel (%p330) target = $region48
        $region47: #{tpu_custom_call.1} parent=39 // pred_region
          %333 = dma.done %s326, 128
        $region48: #{tpu_custom_call.1} parent=39 // pred_fallthru
          _
        %s334 = sand.u32 %s26, 1
        %s335 = scalar_lea.sflag [#allocation7], %s334
        %s336 = sand.u32 %s120, 1
        %s337 = smul.addr %s336, 8
        %s338 = scalar_lea.vmem [#allocation8], %s337
        // Predicated region
        $region49: #{tpu_custom_call.1} parent=39 // pred_check
          %p339 = pneg %p133
        $region50: #{tpu_custom_call.1} parent=39 // pred_check_branch
          %341 = sbr.rel (%p339) target = $region52
        $region51: #{tpu_custom_call.1} parent=39 // pred_region
          %342 = dma.done %s335, 128
        $region52: #{tpu_custom_call.1} parent=39 // pred_fallthru
          _
        // Predicated region
        $region53: #{tpu_custom_call.1} parent=39 // pred_check
          %p343 = pneg %p154
        $region54: #{tpu_custom_call.1} parent=39 // pred_check_branch
          %345 = sbr.rel (%p343) target = $region56
        $region55: #{tpu_custom_call.1} parent=39 // pred_region
          %346 = dma.done [#allocation10], 192
        $region56: #{tpu_custom_call.1} parent=39 // pred_fallthru
          _
        %s347 = sand.u32 %s48, 1
        %s348 = scalar_lea.sflag [#allocation4], %s347
        %s349 = sand.u32 %s48, 1
        %s350 = smul.addr %s349, 64
        %s351 = scalar_lea.vmem [#allocation3], %s350
        %p352 = pneg %p61
        %p353 = pneg %p58
        %s354 = sand.u32 %s26, 1
        %s355 = scalar_lea.sflag [#allocation7], %s354
        %s356 = sand.u32 %s84, 1
        %s357 = smul.addr %s356, 8
        %s358 = scalar_lea.vmem [#allocation6], %s357
        %p359 = pneg %p97
        %p360 = pneg %p94
        %s361 = sand.u32 %s26, 1
        %s362 = scalar_lea.sflag [#allocation7], %s361
        %s363 = sand.u32 %s120, 1
        %s364 = smul.addr %s363, 8
        %s365 = scalar_lea.vmem [#allocation8], %s364
        %p366 = pneg %p133
        %p367 = pneg %p130
        %p368 = pneg %p154
        %p369 = pneg %p151
        %p370 = pneg %p175
        %p371 = pneg %p172
        %p372 = pneg %p203
        %p373 = pneg %p200
        %s374 = sand.u32 %s190, 1
        %s375 = scalar_lea.sflag [#allocation5], %s374
        %s376 = sand.u32 %s190, 1
        %s377 = smul.addr %s376, 64
        %s378 = scalar_lea.vmem [#allocation11], %s377
        %s379 = smul.u32 8, %s31
        %s380 = smul.u32 %s31, 8
        %s381 = ssub.s32 %s380, 1
        %p382 = scmp.gt.s32.totalorder %s381, 0
        %s383 = scalar_select %p382, %s381, 0
        %s384 = sadd.s32 %s31, 1
        %s385 = smul.u32 %s384, 8
        %p386 = scmp.lt.s32.totalorder %s385, 7
        %s387 = scalar_select %p386, %s385, 7
        %s388 = smul.u32 8, %s31
        %389 = vst [vmem:[#allocation2] sm:$0x1] 0.0
        %390 = vst [vmem:[#allocation2 + $0x10] sm:$0x1] 0.0
        %391 = vst [vmem:[#allocation2 + $0x20] sm:$0x1] 0.0
        %392 = vst [vmem:[#allocation2 + $0x30] sm:$0x1] 0.0
        %393 = vst [vmem:[#allocation2 + $0x40] sm:$0x1] 0.0
        %394 = vst [vmem:[#allocation2 + $0x50] sm:$0x1] 0.0
        %395 = vst [vmem:[#allocation2 + $0x60] sm:$0x1] 0.0
        %396 = vst [vmem:[#allocation2 + $0x70] sm:$0x1] 0.0
        %397 = vst [vmem:[#allocation2 + $0x80] sm:$0x1] 0.0
        %398 = vst [vmem:[#allocation2 + $0x90] sm:$0x1] 0.0
        %399 = vst [vmem:[#allocation2 + $0x9] sm:$0x1] 0.0
        %400 = vst [vmem:[#allocation2 + $0x19] sm:$0x1] 0.0
        %401 = vst [vmem:[#allocation2 + $0x29] sm:$0x1] 0.0
        %402 = vst [vmem:[#allocation2 + $0x39] sm:$0x1] 0.0
        %403 = vst [vmem:[#allocation2 + $0x49] sm:$0x1] 0.0
        %404 = vst [vmem:[#allocation2 + $0x59] sm:$0x1] 0.0
        %405 = vst [vmem:[#allocation2 + $0x69] sm:$0x1] 0.0
        %406 = vst [vmem:[#allocation2 + $0x79] sm:$0x1] 0.0
        %407 = vst [vmem:[#allocation2 + $0x89] sm:$0x1] 0.0
        %408 = vst [vmem:[#allocation2 + $0x99] sm:$0x1] 0.0
        %v409 = vld [vmem:[%s320] sm:$0xff]
        %v410 = vld [vmem:[%s320 + $0x8] sm:$0xff]
        %v411 = vld [vmem:[%s320 + $0x10] sm:$0xff]
        %v412 = vld [vmem:[%s320 + $0x18] sm:$0xff]
        %v413 = vld [vmem:[%s320 + $0x20] sm:$0xff]
        %v414 = vld [vmem:[%s320 + $0x28] sm:$0xff]
        %v415 = vld [vmem:[%s320 + $0x30] sm:$0xff]
        %v416 = vld [vmem:[%s320 + $0x38] sm:$0xff]
        %s417 = scalar_lea.vmem [#allocation2], 16
        %418 = vst [vmem:[%s417 + $0x1] sm:$0xff] %v409
        %419 = vst [vmem:[%s417 + $0x11] sm:$0xff] %v410
        %420 = vst [vmem:[%s417 + $0x21] sm:$0xff] %v411
        %421 = vst [vmem:[%s417 + $0x31] sm:$0xff] %v412
        %422 = vst [vmem:[%s417 + $0x41] sm:$0xff] %v413
        %423 = vst [vmem:[%s417 + $0x51] sm:$0xff] %v414
        %424 = vst [vmem:[%s417 + $0x61] sm:$0xff] %v415
        %425 = vst [vmem:[%s417 + $0x71] sm:$0xff] %v416
        %p426 = scmp.gt.s32.totalorder %s31, 0
        %v427 = vld [vmem:[%s329] sm:$0xff]
        %s428 = scalar_select %p426, 1, 0
        %v429 = vstv %s428
        %vm430 = vcmp.eq.s32.totalorder %v429, 1
        %v431 = vsel %vm430, %v427, 0.0
        %432 = vst [vmem:[#allocation2 + $0x1] sm:$0xff] %v431
        %p433 = scmp.lt.s32.totalorder %s31, 0
        %v434 = vld [vmem:[%s338] sm:$0xff]
        %s435 = scalar_select %p433, 1, 0
        %v436 = vstv %s435
        %vm437 = vcmp.eq.s32.totalorder %v436, 1
        %v438 = vsel %vm437, %v434, 0.0
        %s439 = scalar_lea.vmem [#allocation2], 144
        %440 = vst [vmem:[%s439 + $0x1] sm:$0xff] %v438
        %v441 = vld [vmem:[#allocation2] sm:$0xff]
        %v442 = vld [vmem:[#allocation2 + $0x8] sm:$0x3]
        %v443 = vld [vmem:[#allocation2 + $0x10] sm:$0xff]
        %v444 = vld [vmem:[#allocation2 + $0x18] sm:$0x3]
        %v445 = vld [vmem:[#allocation2 + $0x20] sm:$0xff]
        %v446 = vld [vmem:[#allocation2 + $0x28] sm:$0x3]
        %v447 = vld [vmem:[#allocation2 + $0x30] sm:$0xff]
        %v448 = vld [vmem:[#allocation2 + $0x38] sm:$0x3]
        %v449 = vld [vmem:[#allocation2 + $0x40] sm:$0xff]
        %v450 = vld [vmem:[#allocation2 + $0x48] sm:$0x3]
        %v451 = vld [vmem:[#allocation2 + $0x50] sm:$0xff]
        %v452 = vld [vmem:[#allocation2 + $0x58] sm:$0x3]
        %v453 = vld [vmem:[#allocation2 + $0x60] sm:$0xff]
        %v454 = vld [vmem:[#allocation2 + $0x68] sm:$0x3]
        %v455 = vld [vmem:[#allocation2 + $0x70] sm:$0xff]
        %v456 = vld [vmem:[#allocation2 + $0x78] sm:$0x3]
        %v457 = vld [vmem:[#allocation2 + $0x80] sm:$0xff]
        %v458 = vld [vmem:[#allocation2 + $0x88] sm:$0x3]
        %v459 = vld [vmem:[#allocation2 + $0x90] sm:$0xff]
        %v460 = vld [vmem:[#allocation2 + $0x98] sm:$0x3]
        %v461 = vld [vmem:[#allocation9] sm:$0x7]
        %v462 = vld [vmem:[#allocation9 + $0x4] sm:$0x7]
        %v463 = vld [vmem:[#allocation9 + $0x8] sm:$0x7]
        %v464 = vld [vmem:[%s4] sm:$0x1]
        %v465 = vlaneseq
        %v466 = vshrl.u32 %v465, 7
        %v467 = vsub.s32 1, %v466
        %v468 = vrot.slane %v462, %v467
        %v469 = vmul.f32 %v443, %v468
        %v470 = vmul.f32 %v444, %v468
        %v471 = vmul.f32 %v445, %v468
        %v472 = vmul.f32 %v446, %v468
        %v473 = vmul.f32 %v447, %v468
        %v474 = vmul.f32 %v448, %v468
        %v475 = vmul.f32 %v449, %v468
        %v476 = vmul.f32 %v450, %v468
        %v477 = vmul.f32 %v451, %v468
        %v478 = vmul.f32 %v452, %v468
        %v479 = vmul.f32 %v453, %v468
        %v480 = vmul.f32 %v454, %v468
        %v481 = vmul.f32 %v455, %v468
        %v482 = vmul.f32 %v456, %v468
        %v483 = vmul.f32 %v457, %v468
        %v484 = vmul.f32 %v458, %v468
        %v486 = vlaneseq
        %v487 = vshrl.u32 %v486, 7
        %v488 = vsub.s32 0, %v487
        %v489 = vrot.slane %v464, %v488
        %v491 = vadd.f32 %v469, %v489
        %v492 = vadd.f32 %v470, %v489
        %v493 = vadd.f32 %v471, %v489
        %v494 = vadd.f32 %v472, %v489
        %v495 = vadd.f32 %v473, %v489
        %v496 = vadd.f32 %v474, %v489
        %v497 = vadd.f32 %v475, %v489
        %v498 = vadd.f32 %v476, %v489
        %v499 = vadd.f32 %v477, %v489
        %v500 = vadd.f32 %v478, %v489
        %v501 = vadd.f32 %v479, %v489
        %v502 = vadd.f32 %v480, %v489
        %v503 = vadd.f32 %v481, %v489
        %v504 = vadd.f32 %v482, %v489
        %v505 = vadd.f32 %v483, %v489
        %v506 = vadd.f32 %v484, %v489
        %v507 = vlaneseq
        %v508 = vshrl.u32 %v507, 7
        %v509 = vsub.s32 0, %v508
        %v510 = vrot.slane %v461, %v509
        %v511 = vmul.f32 %v441, %v510
        %v512 = vmul.f32 %v443, %v510
        %v513 = vmul.f32 %v445, %v510
        %v514 = vmul.f32 %v447, %v510
        %v515 = vmul.f32 %v449, %v510
        %v516 = vmul.f32 %v451, %v510
        %v517 = vmul.f32 %v453, %v510
        %v518 = vmul.f32 %v455, %v510
        %v527 = vrot.slane %v511, 7
        %v528 = vrot.slane %v512, 7
        %v529 = vrot.slane %v513, 7
        %v530 = vrot.slane %v514, 7
        %v531 = vrot.slane %v515, 7
        %v532 = vrot.slane %v516, 7
        %v533 = vrot.slane %v517, 7
        %v534 = vrot.slane %v518, 7
        %v543 = vadd.f32 %v491, %v527
        %v544 = vadd.f32 %v492, %v527
        %v545 = vadd.f32 %v493, %v528
        %v546 = vadd.f32 %v494, %v528
        %v547 = vadd.f32 %v495, %v529
        %v548 = vadd.f32 %v496, %v529
        %v549 = vadd.f32 %v497, %v530
        %v550 = vadd.f32 %v498, %v530
        %v551 = vadd.f32 %v499, %v531
        %v552 = vadd.f32 %v500, %v531
        %v553 = vadd.f32 %v501, %v532
        %v554 = vadd.f32 %v502, %v532
        %v555 = vadd.f32 %v503, %v533
        %v556 = vadd.f32 %v504, %v533
        %v557 = vadd.f32 %v505, %v534
        %v558 = vadd.f32 %v506, %v534
        %v559 = vlaneseq
        %v560 = vshrl.u32 %v559, 7
        %v561 = vsub.s32 1, %v560
        %v562 = vrot.slane %v461, %v561
        %v563 = vmul.f32 %v441, %v562
        %v564 = vmul.f32 %v442, %v562
        %v565 = vmul.f32 %v443, %v562
        %v566 = vmul.f32 %v444, %v562
        %v567 = vmul.f32 %v445, %v562
        %v568 = vmul.f32 %v446, %v562
        %v569 = vmul.f32 %v447, %v562
        %v570 = vmul.f32 %v448, %v562
        %v571 = vmul.f32 %v449, %v562
        %v572 = vmul.f32 %v450, %v562
        %v573 = vmul.f32 %v451, %v562
        %v574 = vmul.f32 %v452, %v562
        %v575 = vmul.f32 %v453, %v562
        %v576 = vmul.f32 %v454, %v562
        %v577 = vmul.f32 %v455, %v562
        %v578 = vmul.f32 %v456, %v562
        %v579 = vadd.f32 %v543, %v563
        %v580 = vadd.f32 %v544, %v564
        %v581 = vadd.f32 %v545, %v565
        %v582 = vadd.f32 %v546, %v566
        %v583 = vadd.f32 %v547, %v567
        %v584 = vadd.f32 %v548, %v568
        %v585 = vadd.f32 %v549, %v569
        %v586 = vadd.f32 %v550, %v570
        %v587 = vadd.f32 %v551, %v571
        %v588 = vadd.f32 %v552, %v572
        %v589 = vadd.f32 %v553, %v573
        %v590 = vadd.f32 %v554, %v574
        %v591 = vadd.f32 %v555, %v575
        %v592 = vadd.f32 %v556, %v576
        %v593 = vadd.f32 %v557, %v577
        %v594 = vadd.f32 %v558, %v578
        %v595 = vlaneseq
        %v596 = vshrl.u32 %v595, 7
        %v597 = vsub.s32 2, %v596
        %v598 = vrot.slane %v461, %v597
        %v599 = vmul.f32 %v441, %v598
        %v600 = vmul.f32 %v442, %v598
        %v601 = vmul.f32 %v443, %v598
        %v602 = vmul.f32 %v444, %v598
        %v603 = vmul.f32 %v445, %v598
        %v604 = vmul.f32 %v446, %v598
        %v605 = vmul.f32 %v447, %v598
        %v606 = vmul.f32 %v448, %v598
        %v607 = vmul.f32 %v449, %v598
        %v608 = vmul.f32 %v450, %v598
        %v609 = vmul.f32 %v451, %v598
        %v610 = vmul.f32 %v452, %v598
        %v611 = vmul.f32 %v453, %v598
        %v612 = vmul.f32 %v454, %v598
        %v613 = vmul.f32 %v455, %v598
        %v614 = vmul.f32 %v456, %v598
        %vm631 = vcmask 1046528
        %v632 = vrot.slane %v599, 1
        %v633 = vrot.slane %v600, 1
        %v634 = vsel %vm631, %v632, %v633
        %v635 = vrot.slane %v601, 1
        %v636 = vrot.slane %v602, 1
        %v637 = vsel %vm631, %v635, %v636
        %v638 = vrot.slane %v603, 1
        %v639 = vrot.slane %v604, 1
        %v640 = vsel %vm631, %v638, %v639
        %v641 = vrot.slane %v605, 1
        %v642 = vrot.slane %v606, 1
        %v643 = vsel %vm631, %v641, %v642
        %v644 = vrot.slane %v607, 1
        %v645 = vrot.slane %v608, 1
        %v646 = vsel %vm631, %v644, %v645
        %v647 = vrot.slane %v609, 1
        %v648 = vrot.slane %v610, 1
        %v649 = vsel %vm631, %v647, %v648
        %v650 = vrot.slane %v611, 1
        %v651 = vrot.slane %v612, 1
        %v652 = vsel %vm631, %v650, %v651
        %v653 = vrot.slane %v613, 1
        %v654 = vrot.slane %v614, 1
        %v655 = vsel %vm631, %v653, %v654
        %v672 = vadd.f32 %v579, %v634
        %v673 = vadd.f32 %v580, %v633
        %v674 = vadd.f32 %v581, %v637
        %v675 = vadd.f32 %v582, %v636
        %v676 = vadd.f32 %v583, %v640
        %v677 = vadd.f32 %v584, %v639
        %v678 = vadd.f32 %v585, %v643
        %v679 = vadd.f32 %v586, %v642
        %v680 = vadd.f32 %v587, %v646
        %v681 = vadd.f32 %v588, %v645
        %v682 = vadd.f32 %v589, %v649
        %v683 = vadd.f32 %v590, %v648
        %v684 = vadd.f32 %v591, %v652
        %v685 = vadd.f32 %v592, %v651
        %v686 = vadd.f32 %v593, %v655
        %v687 = vadd.f32 %v594, %v654
        %v688 = vlaneseq
        %v689 = vshrl.u32 %v688, 7
        %v690 = vsub.s32 0, %v689
        %v691 = vrot.slane %v462, %v690
        %v692 = vmul.f32 %v443, %v691
        %v693 = vmul.f32 %v445, %v691
        %v694 = vmul.f32 %v447, %v691
        %v695 = vmul.f32 %v449, %v691
        %v696 = vmul.f32 %v451, %v691
        %v697 = vmul.f32 %v453, %v691
        %v698 = vmul.f32 %v455, %v691
        %v699 = vmul.f32 %v457, %v691
        %v708 = vrot.slane %v692, 7
        %v709 = vrot.slane %v693, 7
        %v710 = vrot.slane %v694, 7
        %v711 = vrot.slane %v695, 7
        %v712 = vrot.slane %v696, 7
        %v713 = vrot.slane %v697, 7
        %v714 = vrot.slane %v698, 7
        %v715 = vrot.slane %v699, 7
        %v724 = vadd.f32 %v672, %v708
        %v725 = vadd.f32 %v673, %v708
        %v726 = vadd.f32 %v674, %v709
        %v727 = vadd.f32 %v675, %v709
        %v728 = vadd.f32 %v676, %v710
        %v729 = vadd.f32 %v677, %v710
        %v730 = vadd.f32 %v678, %v711
        %v731 = vadd.f32 %v679, %v711
        %v732 = vadd.f32 %v680, %v712
        %v733 = vadd.f32 %v681, %v712
        %v734 = vadd.f32 %v682, %v713
        %v735 = vadd.f32 %v683, %v713
        %v736 = vadd.f32 %v684, %v714
        %v737 = vadd.f32 %v685, %v714
        %v738 = vadd.f32 %v686, %v715
        %v739 = vadd.f32 %v687, %v715
        %v740 = vlaneseq
        %v741 = vshrl.u32 %v740, 7
        %v742 = vsub.s32 2, %v741
        %v743 = vrot.slane %v462, %v742
        %v744 = vmul.f32 %v443, %v743
        %v745 = vmul.f32 %v444, %v743
        %v746 = vmul.f32 %v445, %v743
        %v747 = vmul.f32 %v446, %v743
        %v748 = vmul.f32 %v447, %v743
        %v749 = vmul.f32 %v448, %v743
        %v750 = vmul.f32 %v449, %v743
        %v751 = vmul.f32 %v450, %v743
        %v752 = vmul.f32 %v451, %v743
        %v753 = vmul.f32 %v452, %v743
        %v754 = vmul.f32 %v453, %v743
        %v755 = vmul.f32 %v454, %v743
        %v756 = vmul.f32 %v455, %v743
        %v757 = vmul.f32 %v456, %v743
        %v758 = vmul.f32 %v457, %v743
        %v759 = vmul.f32 %v458, %v743
        %v776 = vrot.slane %v744, 1
        %v777 = vrot.slane %v745, 1
        %v778 = vsel %vm631, %v776, %v777
        %v779 = vrot.slane %v746, 1
        %v780 = vrot.slane %v747, 1
        %v781 = vsel %vm631, %v779, %v780
        %v782 = vrot.slane %v748, 1
        %v783 = vrot.slane %v749, 1
        %v784 = vsel %vm631, %v782, %v783
        %v785 = vrot.slane %v750, 1
        %v786 = vrot.slane %v751, 1
        %v787 = vsel %vm631, %v785, %v786
        %v788 = vrot.slane %v752, 1
        %v789 = vrot.slane %v753, 1
        %v790 = vsel %vm631, %v788, %v789
        %v791 = vrot.slane %v754, 1
        %v792 = vrot.slane %v755, 1
        %v793 = vsel %vm631, %v791, %v792
        %v794 = vrot.slane %v756, 1
        %v795 = vrot.slane %v757, 1
        %v796 = vsel %vm631, %v794, %v795
        %v797 = vrot.slane %v758, 1
        %v798 = vrot.slane %v759, 1
        %v799 = vsel %vm631, %v797, %v798
        %v816 = vadd.f32 %v724, %v778
        %v817 = vadd.f32 %v725, %v777
        %v818 = vadd.f32 %v726, %v781
        %v819 = vadd.f32 %v727, %v780
        %v820 = vadd.f32 %v728, %v784
        %v821 = vadd.f32 %v729, %v783
        %v822 = vadd.f32 %v730, %v787
        %v823 = vadd.f32 %v731, %v786
        %v824 = vadd.f32 %v732, %v790
        %v825 = vadd.f32 %v733, %v789
        %v826 = vadd.f32 %v734, %v793
        %v827 = vadd.f32 %v735, %v792
        %v828 = vadd.f32 %v736, %v796
        %v829 = vadd.f32 %v737, %v795
        %v830 = vadd.f32 %v738, %v799
        %v831 = vadd.f32 %v739, %v798
        %v832 = vlaneseq
        %v833 = vshrl.u32 %v832, 7
        %v834 = vsub.s32 0, %v833
        %v835 = vrot.slane %v463, %v834
        %v836 = vmul.f32 %v445, %v835
        %v837 = vmul.f32 %v447, %v835
        %v838 = vmul.f32 %v449, %v835
        %v839 = vmul.f32 %v451, %v835
        %v840 = vmul.f32 %v453, %v835
        %v841 = vmul.f32 %v455, %v835
        %v842 = vmul.f32 %v457, %v835
        %v843 = vmul.f32 %v459, %v835
        %v852 = vrot.slane %v836, 7
        %v853 = vrot.slane %v837, 7
        %v854 = vrot.slane %v838, 7
        %v855 = vrot.slane %v839, 7
        %v856 = vrot.slane %v840, 7
        %v857 = vrot.slane %v841, 7
        %v858 = vrot.slane %v842, 7
        %v859 = vrot.slane %v843, 7
        %v868 = vadd.f32 %v816, %v852
        %v869 = vadd.f32 %v817, %v852
        %v870 = vadd.f32 %v818, %v853
        %v871 = vadd.f32 %v819, %v853
        %v872 = vadd.f32 %v820, %v854
        %v873 = vadd.f32 %v821, %v854
        %v874 = vadd.f32 %v822, %v855
        %v875 = vadd.f32 %v823, %v855
        %v876 = vadd.f32 %v824, %v856
        %v877 = vadd.f32 %v825, %v856
        %v878 = vadd.f32 %v826, %v857
        %v879 = vadd.f32 %v827, %v857
        %v880 = vadd.f32 %v828, %v858
        %v881 = vadd.f32 %v829, %v858
        %v882 = vadd.f32 %v830, %v859
        %v883 = vadd.f32 %v831, %v859
        %v884 = vlaneseq
        %v885 = vshrl.u32 %v884, 7
        %v886 = vsub.s32 1, %v885
        %v887 = vrot.slane %v463, %v886
        %v888 = vmul.f32 %v445, %v887
        %v889 = vmul.f32 %v446, %v887
        %v890 = vmul.f32 %v447, %v887
        %v891 = vmul.f32 %v448, %v887
        %v892 = vmul.f32 %v449, %v887
        %v893 = vmul.f32 %v450, %v887
        %v894 = vmul.f32 %v451, %v887
        %v895 = vmul.f32 %v452, %v887
        %v896 = vmul.f32 %v453, %v887
        %v897 = vmul.f32 %v454, %v887
        %v898 = vmul.f32 %v455, %v887
        %v899 = vmul.f32 %v456, %v887
        %v900 = vmul.f32 %v457, %v887
        %v901 = vmul.f32 %v458, %v887
        %v902 = vmul.f32 %v459, %v887
        %v903 = vmul.f32 %v460, %v887
        %v904 = vadd.f32 %v868, %v888
        %v905 = vadd.f32 %v869, %v889
        %v906 = vadd.f32 %v870, %v890
        %v907 = vadd.f32 %v871, %v891
        %v908 = vadd.f32 %v872, %v892
        %v909 = vadd.f32 %v873, %v893
        %v910 = vadd.f32 %v874, %v894
        %v911 = vadd.f32 %v875, %v895
        %v912 = vadd.f32 %v876, %v896
        %v913 = vadd.f32 %v877, %v897
        %v914 = vadd.f32 %v878, %v898
        %v915 = vadd.f32 %v879, %v899
        %v916 = vadd.f32 %v880, %v900
        %v917 = vadd.f32 %v881, %v901
        %v918 = vadd.f32 %v882, %v902
        %v919 = vadd.f32 %v883, %v903
        %v920 = vlaneseq
        %v921 = vshrl.u32 %v920, 7
        %v922 = vsub.s32 2, %v921
        %v923 = vrot.slane %v463, %v922
        %v924 = vmul.f32 %v445, %v923
        %v925 = vmul.f32 %v446, %v923
        %v926 = vmul.f32 %v447, %v923
        %v927 = vmul.f32 %v448, %v923
        %v928 = vmul.f32 %v449, %v923
        %v929 = vmul.f32 %v450, %v923
        %v930 = vmul.f32 %v451, %v923
        %v931 = vmul.f32 %v452, %v923
        %v932 = vmul.f32 %v453, %v923
        %v933 = vmul.f32 %v454, %v923
        %v934 = vmul.f32 %v455, %v923
        %v935 = vmul.f32 %v456, %v923
        %v936 = vmul.f32 %v457, %v923
        %v937 = vmul.f32 %v458, %v923
        %v938 = vmul.f32 %v459, %v923
        %v939 = vmul.f32 %v460, %v923
        %v956 = vrot.slane %v924, 1
        %v957 = vrot.slane %v925, 1
        %v958 = vsel %vm631, %v956, %v957
        %v959 = vrot.slane %v926, 1
        %v960 = vrot.slane %v927, 1
        %v961 = vsel %vm631, %v959, %v960
        %v962 = vrot.slane %v928, 1
        %v963 = vrot.slane %v929, 1
        %v964 = vsel %vm631, %v962, %v963
        %v965 = vrot.slane %v930, 1
        %v966 = vrot.slane %v931, 1
        %v967 = vsel %vm631, %v965, %v966
        %v968 = vrot.slane %v932, 1
        %v969 = vrot.slane %v933, 1
        %v970 = vsel %vm631, %v968, %v969
        %v971 = vrot.slane %v934, 1
        %v972 = vrot.slane %v935, 1
        %v973 = vsel %vm631, %v971, %v972
        %v974 = vrot.slane %v936, 1
        %v975 = vrot.slane %v937, 1
        %v976 = vsel %vm631, %v974, %v975
        %v977 = vrot.slane %v938, 1
        %v978 = vrot.slane %v939, 1
        %v979 = vsel %vm631, %v977, %v978
        %v996 = vadd.f32 %v904, %v958
        %v997 = vadd.f32 %v905, %v957
        %v998 = vadd.f32 %v906, %v961
        %v999 = vadd.f32 %v907, %v960
        %v1000 = vadd.f32 %v908, %v964
        %v1001 = vadd.f32 %v909, %v963
        %v1002 = vadd.f32 %v910, %v967
        %v1003 = vadd.f32 %v911, %v966
        %v1004 = vadd.f32 %v912, %v970
        %v1005 = vadd.f32 %v913, %v969
        %v1006 = vadd.f32 %v914, %v973
        %v1007 = vadd.f32 %v915, %v972
        %v1008 = vadd.f32 %v916, %v976
        %v1009 = vadd.f32 %v917, %v975
        %v1010 = vadd.f32 %v918, %v979
        %v1011 = vadd.f32 %v919, %v978
        %1012 = vst [vmem:[%s378 - $0x1] sm:$0xfe] %v996
        %1013 = vst [vmem:[%s378 + $0x7] sm:$0x1] %v997
        %1014 = vst [vmem:[%s378 + $0x7] sm:$0xfe] %v998
        %1015 = vst [vmem:[%s378 + $0xf] sm:$0x1] %v999
        %1016 = vst [vmem:[%s378 + $0xf] sm:$0xfe] %v1000
        %1017 = vst [vmem:[%s378 + $0x17] sm:$0x1] %v1001
        %1018 = vst [vmem:[%s378 + $0x17] sm:$0xfe] %v1002
        %1019 = vst [vmem:[%s378 + $0x1f] sm:$0x1] %v1003
        %1020 = vst [vmem:[%s378 + $0x1f] sm:$0xfe] %v1004
        %1021 = vst [vmem:[%s378 + $0x27] sm:$0x1] %v1005
        %1022 = vst [vmem:[%s378 + $0x27] sm:$0xfe] %v1006
        %1023 = vst [vmem:[%s378 + $0x2f] sm:$0x1] %v1007
        %1024 = vst [vmem:[%s378 + $0x2f] sm:$0xfe] %v1008
        %1025 = vst [vmem:[%s378 + $0x37] sm:$0x1] %v1009
        %1026 = vst [vmem:[%s378 + $0x37] sm:$0xfe] %v1010
        %1027 = vst [vmem:[%s378 + $0x3f] sm:$0x1] %v1011
        %s1028 = sand.u32 %s190, 1
        %s1029 = scalar_lea.sflag [#allocation5], %s1028
        %s1030 = sand.u32 %s190, 1
        %s1031 = smul.addr %s1030, 64
        %s1032 = scalar_lea.vmem [#allocation11], %s1031
        // Predicated region
        $region57: #{tpu_custom_call.1} parent=39 // pred_check
          %p1033 = pneg %p200
        $region58: #{tpu_custom_call.1} parent=39 // pred_check_branch
          %1035 = sbr.rel (%p1033) target = $region60
        $region59: #{tpu_custom_call.1} parent=39 // pred_region
          %s1036 = smul.u32 8, %s31
          %s1038 = ssub.s32 1024, 1024
          %1039 = vsyncadd %s1029, %s1038
          %s1040 = smul.addr %s30, 8
          %s1041 = sadd.s32 %s1036, %s1040
          %s1042 = smul.addr %s1041, 128
          %s1043 = scalar_lea.hbm %s5, %s1042
          %s1044 = sshll.u32 %s1032, 4
          %s1045 = int_to_ptr.vmem [resolvable:$true] %s1044
          %1050 = dma.vmem_to_hbm [thread:$0]  %s1045, 1024, %s1043, %s1029, 128, 128, 8
        $region60: #{tpu_custom_call.1} parent=39 // pred_fallthru
          _
      $region40: #{tpu_custom_call.1} parent=5 // pred_fallthru
        _
      %p1051 = scmp.le.s32.totalorder 2, %s21
      // Predicated region
      $region61: #{tpu_custom_call.1} parent=5 // pred_check
        %p1052 = pneg %p1051
      $region62: #{tpu_custom_call.1} parent=5 // pred_check_branch
        %1054 = sbr.rel (%p1052) target = $region64
      $region63: #{tpu_custom_call.1} parent=5 // pred_region
        %s1055 = ssub.s32 %s21, 2
        // Predicated region
        $region65: #{tpu_custom_call.1} parent=63 // pred_check
          %p1056 = pneg %p206
        $region66: #{tpu_custom_call.1} parent=63 // pred_check_branch
          %1058 = sbr.rel (%p1056) target = $region68
        $region67: #{tpu_custom_call.1} parent=63 // pred_region
          %s1059 = sand.u32 %s191, 1
          %s1060 = scalar_lea.sflag [#allocation5], %s1059
          %s1061 = sand.u32 %s191, 1
          %s1062 = smul.addr %s1061, 64
          %s1063 = scalar_lea.vmem [#allocation11], %s1062
          %1064 = dma.done %s1060, 1024
        $region68: #{tpu_custom_call.1} parent=63 // pred_fallthru
          _
      $region64: #{tpu_custom_call.1} parent=5 // pred_fallthru
        _
    $region6: #{tpu_custom_call.1} parent=1 // loop_footer
      %s25 = sadd.s32 1, %s21
    $region7: #{tpu_custom_call.1} parent=1 // loop_footer_branch
      %20 = sbr.rel target = $region3
    $region8: #{tpu_custom_call.1} parent=1 // loop_exit
      _
    %1065 = vsyncpa [#allocation4], 1
    %s1066 = scalar_lea.sflag [#allocation4], 1
    %1067 = vsyncpa %s1066, 1
    %1068 = vsyncpa [#allocation7], 1
    %s1069 = scalar_lea.sflag [#allocation7], 1
    %1070 = vsyncpa %s1069, 1
    %1071 = vsyncpa [#allocation10], 1
    %1072 = vsyncpa [#allocation5], 1
    %s1073 = scalar_lea.sflag [#allocation5], 1
    %1074 = vsyncpa %s1073, 1

</llo_original>
